<compile_context>
chip_gen: v5e
topology: v5e:2x2
jax: 0.10.0
libtpu: 0.0.40
codegen_flags: <defaults>
</compile_context>

<pallas_src>
import jax
import jax.numpy as jnp
from jax.experimental import pallas as pl
from jax.experimental.pallas import tpu as pltpu

_LANE = 128        # lane width (last-dim alignment)
_BATCH_ALIGN = 16  # batch-tile granularity (bf16 sublane packing friendly)
_NEG = -1e30       # finite "minus infinity" masking padded class columns


def _round_up(x, m):
    return (x + m - 1) // m * m


def mlp_logsoftmax_kernel(x_ref, w1_ref, b1_ref, w2_ref, b2_ref, o_ref):
    # x tile arrives as f32 (single HBM read); cast to bf16 for the MXU.
    x = x_ref[...].astype(jnp.bfloat16)
    # fc1: (TB, feat) @ (feat, Hp) -> f32 accum, bias + relu in f32.
    h = jnp.dot(x, w1_ref[...], preferred_element_type=jnp.float32)
    h = jnp.maximum(h + b1_ref[...], 0.0)
    # fc2: (TB, Hp) @ (Hp, Np) -> f32 accum, bias in f32.
    logits = jnp.dot(h.astype(jnp.bfloat16), w2_ref[...],
                     preferred_element_type=jnp.float32) + b2_ref[...]
    # Padded class columns carry bias = -1e30: they never win the row max and
    # their exp underflows to exactly 0 in f32, so only real classes count.
    m = jnp.max(logits, axis=1, keepdims=True)            # XLU
    shifted = logits - m
    lse = jnp.log(jnp.sum(jnp.exp(shifted), axis=1, keepdims=True))  # EUP + XLU
    o_ref[...] = shifted - lse                              # lane-dense f32 store


def prepare_params(w1, b1, w2, b2):
    """Pad hidden/class dims to MXU/lane-friendly sizes; cast weights bf16 ONCE."""
    feat, neuron = w1.shape
    num = w2.shape[1]
    # 256-wide N/K tiles once fc1 is big enough to be compute-bound (v6e/v7x
    # MXUs are 2x256^2); 128 otherwise.  Feature (K of fc1) is left unpadded.
    hp_mult = 256 if neuron >= 512 else _LANE
    Hp = _round_up(neuron, hp_mult)
    Np = _round_up(num, _LANE)

    w1_p = jnp.zeros((feat, Hp), jnp.float32).at[:, :neuron].set(w1)
    w2_p = jnp.zeros((Hp, Np), jnp.float32).at[:neuron, :num].set(w2)
    b1_p = jnp.zeros((1, Hp), jnp.float32).at[0, :neuron].set(b1)
    b2_p = jnp.full((1, Np), _NEG, jnp.float32).at[0, :num].set(b2)
    return {
        "w1": w1_p.astype(jnp.bfloat16), "b1": b1_p,
        "w2": w2_p.astype(jnp.bfloat16), "b2": b2_p,
        "feat": feat, "num": num, "Hp": Hp, "Np": Np,
    }


def _choose_tb(B, max_tile):
    """Pick (TB, Bp).  Preference: (1) TB divides B (no batch-pad copy),
    (2) >= 2 grid steps when possible (keeps both v7x TCs busy; ~0.35us extra
    on single-TC parts), (3) as large as the VMEM budget allows."""
    max_tile = max(_BATCH_ALIGN, min(max_tile, B) if B >= _BATCH_ALIGN else B)
    best_single = None
    start = (min(max_tile, B) // _BATCH_ALIGN) * _BATCH_ALIGN
    for tb in range(start, _BATCH_ALIGN - 1, -_BATCH_ALIGN):
        if B % tb == 0:
            if B // tb >= 2:
                return tb, B                 # exact split, >= 2 grid steps
            if best_single is None:
                best_single = tb             # exact split, single step
    if best_single is not None:
        return best_single, B
    if B <= max_tile:
        return B, B                          # full-batch block (always legal)
    tb = (max_tile // _BATCH_ALIGN) * _BATCH_ALIGN
    return tb, _round_up(B, tb)              # last resort: pad the batch


def net_forward(x_nchw, params, *, batch_tile=512):
    """Pallas forward. x_nchw: (B, 1, iSize, iSize) -> (B, num) log-probs."""
    B = x_nchw.shape[0]
    feat, num = params["feat"], params["num"]
    Hp, Np = params["Hp"], params["Np"]

    # Generation-aware VMEM budget.
    try:
        vmem_cap = int(pltpu.get_tpu_info().vmem_capacity_bytes)
    except Exception:
        vmem_cap = 64 << 20   # conservative fallback (v7x per-TC VMEM)

    # Buffer accounting: Buffered(1) weights, double-buffered x/out streams,
    # plus in-kernel f32/bf16 working values.
    weight_bytes = feat * Hp * 2 + Hp * Np * 2 + (Hp + Np) * 4
    per_row_bytes = (2 * feat * 4 + 2 * Np * 4     # double-buffered x / out tiles
                     + Hp * 4 + Np * 4             # f32 h / logits
                     + feat * 2 + Hp * 2)          # in-kernel bf16 casts
    avail = int(0.75 * vmem_cap) - weight_bytes - (4 << 20)
    tb_cap = max(_BATCH_ALIGN, min(batch_tile, avail // max(per_row_bytes, 1)))
    TB, Bp = _choose_tb(B, tb_cap)

    # x.view(-1, iSize*iSize): reshape only, no dtype/pad materialization.
    x2d = x_nchw.reshape(B, feat)
    if Bp != B:  # only when no exact tile exists; pad rows are sliced off below
        x2d = jnp.pad(x2d, ((0, Bp - B), (0, 0)))

    vmem_limit = int(min(int(0.8 * vmem_cap),
                         max(32 << 20, 2 * (weight_bytes + TB * per_row_bytes))))

    const_map = lambda i: (0, 0)
    out = pl.pallas_call(
        mlp_logsoftmax_kernel,
        out_shape=jax.ShapeDtypeStruct((Bp, Np), jnp.float32),
        grid_spec=pltpu.PrefetchScalarGridSpec(
            num_scalar_prefetch=0,
            grid=(Bp // TB,),
            in_specs=[
                # activation stream (f32, read once, double-buffered)
                pl.BlockSpec((TB, feat), lambda i: (i, 0)),
                # VMEM-resident weights/biases: constant index, single-buffered
                pl.BlockSpec((feat, Hp), const_map, pipeline_mode=pl.Buffered(1)),
                pl.BlockSpec((1, Hp), const_map, pipeline_mode=pl.Buffered(1)),
                pl.BlockSpec((Hp, Np), const_map, pipeline_mode=pl.Buffered(1)),
                pl.BlockSpec((1, Np), const_map, pipeline_mode=pl.Buffered(1)),
            ],
            out_specs=pl.BlockSpec((TB, Np), lambda i: (i, 0)),
        ),
        compiler_params=pltpu.CompilerParams(
            dimension_semantics=("parallel",),
            vmem_limit_bytes=vmem_limit,
        ),
        cost_estimate=pl.CostEstimate(
            flops=2 * Bp * (feat * Hp + Hp * Np),
            transcendentals=Bp * Np,
            bytes_accessed=(Bp * feat * 4 + feat * Hp * 2 + Hp * Np * 2
                            + (Hp + Np) * 4 + Bp * Np * 4),
        ),
    )(x2d, params["w1"], params["b1"], params["w2"], params["b2"])

    # drop batch / class padding
    return out[:B, :num]


def init_params(key, input_size, neuron, num):
    """Deterministic synthetic init (PyTorch-Linear-like uniform fan-in bound)."""
    feat = input_size * input_size
    k1, k2, k3, k4 = jax.random.split(key, 4)
    bound1 = 1.0 / jnp.sqrt(feat)
    bound2 = 1.0 / jnp.sqrt(neuron)
    # stored transposed relative to torch.nn.Linear.weight: (in, out)
    w1 = jax.random.uniform(k1, (feat, neuron), jnp.float32, -bound1, bound1)
    b1 = jax.random.uniform(k2, (neuron,), jnp.float32, -bound1, bound1)
    w2 = jax.random.uniform(k3, (neuron, num), jnp.float32, -bound2, bound2)
    b2 = jax.random.uniform(k4, (num,), jnp.float32, -bound2, bound2)
    return w1, b1, w2, b2


if __name__ == "__main__":
    # Small shapes consistent with Net(num, inputSize, Neuron)
    num = 10
    input_size = 16
    neuron = 32
    batch = 2

    key = jax.random.PRNGKey(0)
    kx, kp = jax.random.split(key)
    x = jax.random.normal(kx, (batch, 1, input_size, input_size), jnp.float32)
    w1, b1, w2, b2 = init_params(kp, input_size, neuron, num)

    params = prepare_params(w1, b1, w2, b2)   # pad + cast once, reuse per call
    out = net_forward(x, params)
    out = jax.block_until_ready(out)

    # sanity: shape + log_softmax rows exponentiate-sum to 1
    assert out.shape == (batch, num)
    row_sums = jnp.sum(jnp.exp(out), axis=1)
    assert bool(jnp.all(jnp.abs(row_sums - 1.0) < 1e-4))

    # reference check vs pure-JAX f32 forward.
    # Precision contract: matmul inputs are bf16 (f32 accumulation), so the
    # tolerance is loose (inference-grade), hence 1e-1.
    x2d = x.reshape(batch, input_size * input_size)
    ref = jax.nn.log_softmax(jnp.maximum(x2d @ w1 + b1, 0.0) @ w2 + b2, axis=1)
    assert bool(jnp.max(jnp.abs(out - ref)) < 1e-1)

    print("KERNEL_OK")
</pallas_src>

<mosaic_0001>
module attributes {stable_mosaic.version = 11 : i64} {
  func.func @mlp_logsoftmax_kernel(%arg0: i32, %arg1: memref<2x256xf32, #tpu.memory_space<vmem>>, %arg2: memref<256x128xbf16, #tpu.memory_space<vmem>>, %arg3: memref<1x128xf32, #tpu.memory_space<vmem>>, %arg4: memref<128x128xbf16, #tpu.memory_space<vmem>>, %arg5: memref<1x128xf32, #tpu.memory_space<vmem>>, %arg6: memref<2x128xf32, #tpu.memory_space<vmem>>) attributes {dimension_semantics = [#tpu.dimension_semantics<parallel>], iteration_bounds = array<i64: 1>, scalar_prefetch = 0 : i64, scratch_operands = 0 : i64, tpu.core_type = #tpu.core_type<tc>, window_params = [{transform_indices = @transform_0, window_bounds = array<i64: 2, 256>}, {pipeline_mode = #tpu.pipeline_mode<synchronous>, transform_indices = @transform_1, window_bounds = array<i64: 256, 128>}, {pipeline_mode = #tpu.pipeline_mode<synchronous>, transform_indices = @transform_2, window_bounds = array<i64: 1, 128>}, {pipeline_mode = #tpu.pipeline_mode<synchronous>, transform_indices = @transform_3, window_bounds = array<i64: 128, 128>}, {pipeline_mode = #tpu.pipeline_mode<synchronous>, transform_indices = @transform_4, window_bounds = array<i64: 1, 128>}, {transform_indices = @transform_5, window_bounds = array<i64: 2, 128>}]} {
    %c0 = arith.constant 0 : index
    %c0_0 = arith.constant 0 : index
    %0 = vector.load %arg1[%c0, %c0_0] : memref<2x256xf32, #tpu.memory_space<vmem>>, vector<2x256xf32>
    %1 = arith.truncf %0 : vector<2x256xf32> to vector<2x256xbf16>
    %c0_1 = arith.constant 0 : index
    %c0_2 = arith.constant 0 : index
    %2 = vector.load %arg2[%c0_1, %c0_2] : memref<256x128xbf16, #tpu.memory_space<vmem>>, vector<256x128xbf16>
    %cst = arith.constant dense<0.000000e+00> : vector<2x128xf32>
    %3 = tpu.matmul %1, %2, %cst {dimension_numbers = #tpu.dot_dimension_numbers<[1], [0], [0], [1], [0, 0, 1, 1], [], []>} : vector<2x256xbf16>, vector<256x128xbf16>, vector<2x128xf32> -> vector<2x128xf32>
    %c0_3 = arith.constant 0 : index
    %c0_4 = arith.constant 0 : index
    %4 = vector.load %arg3[%c0_3, %c0_4] : memref<1x128xf32, #tpu.memory_space<vmem>>, vector<1x128xf32>
    %5 = vector.broadcast %4 : vector<1x128xf32> to vector<2x128xf32>
    %6 = arith.addf %3, %5 : vector<2x128xf32>
    %cst_5 = arith.constant 0.000000e+00 : f32
    %7 = vector.broadcast %cst_5 : f32 to vector<2x128xf32>
    %8 = arith.maximumf %6, %7 : vector<2x128xf32>
    %9 = arith.truncf %8 : vector<2x128xf32> to vector<2x128xbf16>
    %c0_6 = arith.constant 0 : index
    %c0_7 = arith.constant 0 : index
    %10 = vector.load %arg4[%c0_6, %c0_7] : memref<128x128xbf16, #tpu.memory_space<vmem>>, vector<128x128xbf16>
    %cst_8 = arith.constant dense<0.000000e+00> : vector<2x128xf32>
    %11 = tpu.matmul %9, %10, %cst_8 {dimension_numbers = #tpu.dot_dimension_numbers<[1], [0], [0], [1], [0, 0, 1, 1], [], []>} : vector<2x128xbf16>, vector<128x128xbf16>, vector<2x128xf32> -> vector<2x128xf32>
    %c0_9 = arith.constant 0 : index
    %c0_10 = arith.constant 0 : index
    %12 = vector.load %arg5[%c0_9, %c0_10] : memref<1x128xf32, #tpu.memory_space<vmem>>, vector<1x128xf32>
    %13 = vector.broadcast %12 : vector<1x128xf32> to vector<2x128xf32>
    %14 = arith.addf %11, %13 : vector<2x128xf32>
    %cst_11 = arith.constant dense<0xFF800000> : vector<2xf32>
    %15 = vector.multi_reduction <maximumf>, %14, %cst_11 [1] : vector<2x128xf32> to vector<2xf32>
    %16 = vector.shape_cast %15 : vector<2xf32> to vector<2x1xf32>
    %17 = vector.broadcast %16 : vector<2x1xf32> to vector<2x128xf32>
    %18 = arith.subf %14, %17 : vector<2x128xf32>
    %19 = math.exp %18 : vector<2x128xf32>
    %cst_12 = arith.constant dense<0.000000e+00> : vector<2xf32>
    %20 = vector.multi_reduction <add>, %19, %cst_12 [1] : vector<2x128xf32> to vector<2xf32>
    %21 = vector.shape_cast %20 : vector<2xf32> to vector<2x1xf32>
    %22 = math.log %21 : vector<2x1xf32>
    %23 = vector.broadcast %22 : vector<2x1xf32> to vector<2x128xf32>
    %24 = arith.subf %18, %23 : vector<2x128xf32>
    %c0_13 = arith.constant 0 : index
    %c0_14 = arith.constant 0 : index
    %25 = vector.load %arg6[%c0_13, %c0_14] : memref<2x128xf32, #tpu.memory_space<vmem>>, vector<2x128xf32>
    tpu.vector_store %arg6[%c0_13, %c0_14], %24 {strides = array<i32>} : memref<2x128xf32, #tpu.memory_space<vmem>>, vector<2x128xf32>,
    return
  }
  func.func @transform_0(%arg0: i32) -> (i32, i32) {
    %c0_i32 = arith.constant 0 : i32
    %c0_i32_0 = arith.constant 0 : i32
    return %arg0, %c0_i32 : i32, i32
  }
  func.func @transform_1(%arg0: i32) -> (i32, i32) {
    %c0_i32 = arith.constant 0 : i32
    %c0_i32_0 = arith.constant 0 : i32
    %c0_i32_1 = arith.constant 0 : i32
    return %c0_i32, %c0_i32_0 : i32, i32
  }
  func.func @transform_2(%arg0: i32) -> (i32, i32) {
    %c0_i32 = arith.constant 0 : i32
    %c0_i32_0 = arith.constant 0 : i32
    %c0_i32_1 = arith.constant 0 : i32
    return %c0_i32, %c0_i32_0 : i32, i32
  }
  func.func @transform_3(%arg0: i32) -> (i32, i32) {
    %c0_i32 = arith.constant 0 : i32
    %c0_i32_0 = arith.constant 0 : i32
    %c0_i32_1 = arith.constant 0 : i32
    return %c0_i32, %c0_i32_0 : i32, i32
  }
  func.func @transform_4(%arg0: i32) -> (i32, i32) {
    %c0_i32 = arith.constant 0 : i32
    %c0_i32_0 = arith.constant 0 : i32
    %c0_i32_1 = arith.constant 0 : i32
    return %c0_i32, %c0_i32_0 : i32, i32
  }
  func.func @transform_5(%arg0: i32) -> (i32, i32) {
    %c0_i32 = arith.constant 0 : i32
    %c0_i32_0 = arith.constant 0 : i32
    return %arg0, %c0_i32 : i32, i32
  }
}

</mosaic_0001>

<llo_original>
// kernel: tpu_custom_call.1
$region0: #{tpu_custom_call.1}
  #allocation0 [shape = 'u32[]', space=smem, size = 0x4, offset = 0x4, fixed_abs, tag = 'smem constant byte address 0x4 - core index']
  #allocation1 [shape = 'u32[72,128]{1,0:T(1,128)}', space=vmem, size = 0x9000, scoped, tag = 'internal scratch']
  %s0 = inlined_call_operand.hbm [shape: f32[2,256], index: 0, kind: input, shape index: {}]
  %s1 = inlined_call_operand.hbm [shape: bf16[256,128], index: 1, kind: input, shape index: {}]
  %s2 = inlined_call_operand.vmem [shape: f32[1,128], index: 2, kind: input, shape index: {}]
  %s3 = inlined_call_operand.hbm [shape: bf16[128,128], index: 3, kind: input, shape index: {}]
  %s4 = inlined_call_operand.vmem [shape: f32[1,128], index: 4, kind: input, shape index: {}]
  %s5 = inlined_call_operand.hbm [shape: f32[2,128], index: 5, kind: output, shape index: {}]
  %s6 = sld [smem:[#allocation0]]
  $region42: #{tpu_custom_call.1} parent=0
    _
  %s8 = ssub.s32 1, %s6
  %s9 = scalar_select 0, %s8, %s6
  $region1: #{tpu_custom_call.1} parent=0
    #allocation2 [shape = 'u8[2048]{0}', space=vmem, size = 0x800, scoped, tag = 'input window, operand 0, single buffered']
    #allocation3 [shape = 's32[1]{0}', space=sflag, size = 0x4, scoped, tag = 'scoped memory for tpu_custom_call.1']
    #allocation4 [shape = 's32[1]{0}', space=sflag, size = 0x4, scoped, tag = 'scoped memory for tpu_custom_call.1']
    #allocation5 [shape = 'u8[65536]{0}', space=vmem, size = 0x10000, scoped, tag = 'input window, operand 1, single buffered']
    #allocation6 [shape = 's32[1]{0}', space=sflag, size = 0x4, scoped, tag = 'scoped memory for tpu_custom_call.1']
    #allocation7 [shape = 'u8[32768]{0}', space=vmem, size = 0x8000, scoped, tag = 'input window, operand 3, single buffered']
    #allocation8 [shape = 'u8[1024]{0}', space=vmem, size = 0x400, scoped, tag = 'output window, operand 0, single buffered']
    %10 = vsyncpa [#allocation3], 0
    %11 = vsyncpa [#allocation6], 0
    %12 = vsyncpa [#allocation4], 0
    // Predicated region
    $region2: #{tpu_custom_call.1} parent=1 // pred_check
      _
    $region3: #{tpu_custom_call.1} parent=1 // pred_check_branch
      %14 = sbr.rel (0) target = $region5
    $region4: #{tpu_custom_call.1} parent=1 // pred_region
      %16 = vsyncadd [#allocation3], 0
      %s18 = sshll.u32 %s0, 4
      %s19 = int_to_ptr.hbm [resolvable:$true] %s18
      %s20 = sshll.u32 [#allocation2], 4
      %s21 = int_to_ptr.vmem [resolvable:$true] %s20
      %23 = dma.hbm_to_vmem [thread:$0]  %s19, 64, %s21, [#allocation3]
    $region5: #{tpu_custom_call.1} parent=1 // pred_fallthru
      _
    // Predicated region
    $region6: #{tpu_custom_call.1} parent=1 // pred_check
      _
    $region7: #{tpu_custom_call.1} parent=1 // pred_check_branch
      %25 = sbr.rel (0) target = $region9
    $region8: #{tpu_custom_call.1} parent=1 // pred_region
      %27 = vsyncadd [#allocation6], 0
      %s28 = sshll.u32 %s1, 4
      %s29 = int_to_ptr.hbm [resolvable:$true] %s28
      %s30 = sshll.u32 [#allocation5], 4
      %s31 = int_to_ptr.vmem [resolvable:$true] %s30
      %36 = dma.hbm_to_vmem [thread:$0]  %s29, 2048, %s31, [#allocation6], 64, 64, 4
    $region9: #{tpu_custom_call.1} parent=1 // pred_fallthru
      _
    // Predicated region
    $region10: #{tpu_custom_call.1} parent=1 // pred_check
      _
    $region11: #{tpu_custom_call.1} parent=1 // pred_check_branch
      %38 = sbr.rel (0) target = $region13
    $region12: #{tpu_custom_call.1} parent=1 // pred_region
      _
    $region13: #{tpu_custom_call.1} parent=1 // pred_fallthru
      _
    // Predicated region
    $region14: #{tpu_custom_call.1} parent=1 // pred_check
      _
    $region15: #{tpu_custom_call.1} parent=1 // pred_check_branch
      %40 = sbr.rel (0) target = $region17
    $region16: #{tpu_custom_call.1} parent=1 // pred_region
      %42 = vsyncadd [#allocation6], 0
      %s43 = sshll.u32 %s3, 4
      %s44 = int_to_ptr.hbm [resolvable:$true] %s43
      %s45 = sshll.u32 [#allocation7], 4
      %s46 = int_to_ptr.vmem [resolvable:$true] %s45
      %51 = dma.hbm_to_vmem [thread:$0]  %s44, 1024, %s46, [#allocation6], 64, 64, 4
    $region17: #{tpu_custom_call.1} parent=1 // pred_fallthru
      _
    // Predicated region
    $region18: #{tpu_custom_call.1} parent=1 // pred_check
      _
    $region19: #{tpu_custom_call.1} parent=1 // pred_check_branch
      %53 = sbr.rel (0) target = $region21
    $region20: #{tpu_custom_call.1} parent=1 // pred_region
      _
    $region21: #{tpu_custom_call.1} parent=1 // pred_fallthru
      _
    // Predicated region
    $region22: #{tpu_custom_call.1} parent=1 // pred_check
      _
    $region23: #{tpu_custom_call.1} parent=1 // pred_check_branch
      %55 = sbr.rel (0) target = $region25
    $region24: #{tpu_custom_call.1} parent=1 // pred_region
      %57 = dma.done [#allocation3], 64
    $region25: #{tpu_custom_call.1} parent=1 // pred_fallthru
      _
    // Predicated region
    $region26: #{tpu_custom_call.1} parent=1 // pred_check
      _
    $region27: #{tpu_custom_call.1} parent=1 // pred_check_branch
      %59 = sbr.rel (0) target = $region29
    $region28: #{tpu_custom_call.1} parent=1 // pred_region
      %61 = dma.done [#allocation6], 2048
    $region29: #{tpu_custom_call.1} parent=1 // pred_fallthru
      _
    // Predicated region
    $region30: #{tpu_custom_call.1} parent=1 // pred_check
      _
    $region31: #{tpu_custom_call.1} parent=1 // pred_check_branch
      %63 = sbr.rel (0) target = $region33
    $region32: #{tpu_custom_call.1} parent=1 // pred_region
      %65 = dma.done [#allocation6], 1024
    $region33: #{tpu_custom_call.1} parent=1 // pred_fallthru
      _
    %v66 = vld [vmem:[#allocation2] sm:$0xf]
    %68 = vst [vmem:[#allocation1] ss:$4 sm:$0xff] %v66
    %v69 = vld.sshfl [vmem:[#allocation1] sm:$0xff pattern:$0x73625140]
    %v70 = vld.sshfl [vmem:[#allocation1 + $0x8] sm:$0xff pattern:$0x73625140]
    %v73 = vpack.c.bf16 %v69, %v69
    %v74 = vpack.c.bf16 %v70, %v70
    %v75 = vld [vmem:[#allocation5] sm:$0xf]
    %v76 = vld [vmem:[#allocation5 + $0x4] sm:$0xf]
    %v77 = vld [vmem:[#allocation5 + $0x8] sm:$0xf]
    %v78 = vld [vmem:[#allocation5 + $0xc] sm:$0xf]
    %v79 = vld [vmem:[#allocation5 + $0x10] sm:$0xf]
    %v80 = vld [vmem:[#allocation5 + $0x14] sm:$0xf]
    %v81 = vld [vmem:[#allocation5 + $0x18] sm:$0xf]
    %v82 = vld [vmem:[#allocation5 + $0x1c] sm:$0xf]
    %v83 = vld [vmem:[#allocation5 + $0x20] sm:$0xf]
    %v84 = vld [vmem:[#allocation5 + $0x24] sm:$0xf]
    %v85 = vld [vmem:[#allocation5 + $0x28] sm:$0xf]
    %v86 = vld [vmem:[#allocation5 + $0x2c] sm:$0xf]
    %v87 = vld [vmem:[#allocation5 + $0x30] sm:$0xf]
    %v88 = vld [vmem:[#allocation5 + $0x34] sm:$0xf]
    %v89 = vld [vmem:[#allocation5 + $0x38] sm:$0xf]
    %v90 = vld [vmem:[#allocation5 + $0x3c] sm:$0xf]
    %v91 = vld [vmem:[#allocation5 + $0x40] sm:$0xf]
    %v92 = vld [vmem:[#allocation5 + $0x44] sm:$0xf]
    %v93 = vld [vmem:[#allocation5 + $0x48] sm:$0xf]
    %v94 = vld [vmem:[#allocation5 + $0x4c] sm:$0xf]
    %v95 = vld [vmem:[#allocation5 + $0x50] sm:$0xf]
    %v96 = vld [vmem:[#allocation5 + $0x54] sm:$0xf]
    %v97 = vld [vmem:[#allocation5 + $0x58] sm:$0xf]
    %v98 = vld [vmem:[#allocation5 + $0x5c] sm:$0xf]
    %v99 = vld [vmem:[#allocation5 + $0x60] sm:$0xf]
    %v100 = vld [vmem:[#allocation5 + $0x64] sm:$0xf]
    %v101 = vld [vmem:[#allocation5 + $0x68] sm:$0xf]
    %v102 = vld [vmem:[#allocation5 + $0x6c] sm:$0xf]
    %v103 = vld [vmem:[#allocation5 + $0x70] sm:$0xf]
    %v104 = vld [vmem:[#allocation5 + $0x74] sm:$0xf]
    %v105 = vld [vmem:[#allocation5 + $0x78] sm:$0xf]
    %v106 = vld [vmem:[#allocation5 + $0x7c] sm:$0xf]
    %v107 = vld [vmem:[%s2] sm:$0x1]
    %v109 = vperm.slane %v107, 0
    %v143 = vunpack.c.l.b16 %v75
    %v144 = vunpack.c.l.b16 %v76
    %v145 = vunpack.c.l.b16 %v77
    %v146 = vunpack.c.l.b16 %v78
    %v147 = vunpack.c.l.b16 %v79
    %v148 = vunpack.c.l.b16 %v80
    %v149 = vunpack.c.l.b16 %v81
    %v150 = vunpack.c.l.b16 %v82
    %v151 = vunpack.c.l.b16 %v83
    %v152 = vunpack.c.l.b16 %v84
    %v153 = vunpack.c.l.b16 %v85
    %v154 = vunpack.c.l.b16 %v86
    %v155 = vunpack.c.l.b16 %v87
    %v156 = vunpack.c.l.b16 %v88
    %v157 = vunpack.c.l.b16 %v89
    %v158 = vunpack.c.l.b16 %v90
    %v159 = vunpack.c.l.b16 %v91
    %v160 = vunpack.c.l.b16 %v92
    %v161 = vunpack.c.l.b16 %v93
    %v162 = vunpack.c.l.b16 %v94
    %v163 = vunpack.c.l.b16 %v95
    %v164 = vunpack.c.l.b16 %v96
    %v165 = vunpack.c.l.b16 %v97
    %v166 = vunpack.c.l.b16 %v98
    %v167 = vunpack.c.l.b16 %v99
    %v168 = vunpack.c.l.b16 %v100
    %v169 = vunpack.c.l.b16 %v101
    %v170 = vunpack.c.l.b16 %v102
    %v171 = vunpack.c.l.b16 %v103
    %v172 = vunpack.c.l.b16 %v104
    %v173 = vunpack.c.l.b16 %v105
    %v174 = vunpack.c.l.b16 %v106
    %v175 = vpack.c.b16 %v144, %v143
    %v176 = vpack.c.b16 %v146, %v145
    %v177 = vpack.c.b16 %v148, %v147
    %v178 = vpack.c.b16 %v150, %v149
    %v179 = vpack.c.b16 %v152, %v151
    %v180 = vpack.c.b16 %v154, %v153
    %v181 = vpack.c.b16 %v156, %v155
    %v182 = vpack.c.b16 %v158, %v157
    %v183 = vpack.c.b16 %v160, %v159
    %v184 = vpack.c.b16 %v162, %v161
    %v185 = vpack.c.b16 %v164, %v163
    %v186 = vpack.c.b16 %v166, %v165
    %v187 = vpack.c.b16 %v168, %v167
    %v188 = vpack.c.b16 %v170, %v169
    %v189 = vpack.c.b16 %v172, %v171
    %v190 = vpack.c.b16 %v174, %v173
    %207 = vmatpush.bf16.msra.mxu0 %v182
    %208 = vmatpush.bf16.msra.mxu0 %v181
    %209 = vmatpush.bf16.msra.mxu0 %v180
    %210 = vmatpush.bf16.msra.mxu0 %v179
    %211 = vmatpush.bf16.msra.mxu0 %v178
    %212 = vmatpush.bf16.msra.mxu0 %v177
    %213 = vmatpush.bf16.msra.mxu0 %v176
    %214 = vmatpush.bf16.msra.mxu0 %v175
    %215 = vmatmul.bf16.gmra.mxu0 %v73
    %v216 = vpop.f32.mrf.mxu0
    %v217 = vadd.f32 %v109, %v216
    %v218 = vpop.f32.mrf.mxu0
    %219 = vdwg.mxu0
    %220 = vmatpush.bf16.msra.mxu0 %v190
    %221 = vmatpush.bf16.msra.mxu0 %v189
    %222 = vmatpush.bf16.msra.mxu0 %v188
    %223 = vmatpush.bf16.msra.mxu0 %v187
    %224 = vmatpush.bf16.msra.mxu0 %v186
    %225 = vmatpush.bf16.msra.mxu0 %v185
    %226 = vmatpush.bf16.msra.mxu0 %v184
    %227 = vmatpush.bf16.msra.mxu0 %v183
    %228 = vmatmul.bf16.gmra.mxu0 %v74
    %v229 = vpop.f32.mrf.mxu0
    %v230 = vadd.f32 %v217, %v229
    %v231 = vpop.f32.mrf.mxu0
    %232 = vdwg.mxu0
    %v233 = vmax.f32 %v230, 0.0
    %v234 = vpack.c.bf16 %v233, %v233
    %v235 = vld [vmem:[#allocation7] sm:$0xf]
    %v236 = vld [vmem:[#allocation7 + $0x4] sm:$0xf]
    %v237 = vld [vmem:[#allocation7 + $0x8] sm:$0xf]
    %v238 = vld [vmem:[#allocation7 + $0xc] sm:$0xf]
    %v239 = vld [vmem:[#allocation7 + $0x10] sm:$0xf]
    %v240 = vld [vmem:[#allocation7 + $0x14] sm:$0xf]
    %v241 = vld [vmem:[#allocation7 + $0x18] sm:$0xf]
    %v242 = vld [vmem:[#allocation7 + $0x1c] sm:$0xf]
    %v243 = vld [vmem:[#allocation7 + $0x20] sm:$0xf]
    %v244 = vld [vmem:[#allocation7 + $0x24] sm:$0xf]
    %v245 = vld [vmem:[#allocation7 + $0x28] sm:$0xf]
    %v246 = vld [vmem:[#allocation7 + $0x2c] sm:$0xf]
    %v247 = vld [vmem:[#allocation7 + $0x30] sm:$0xf]
    %v248 = vld [vmem:[#allocation7 + $0x34] sm:$0xf]
    %v249 = vld [vmem:[#allocation7 + $0x38] sm:$0xf]
    %v250 = vld [vmem:[#allocation7 + $0x3c] sm:$0xf]
    %v251 = vld [vmem:[%s4] sm:$0x1]
    %v253 = vperm.slane %v251, 0
    %v271 = vunpack.c.l.b16 %v235
    %v272 = vunpack.c.l.b16 %v236
    %v273 = vunpack.c.l.b16 %v237
    %v274 = vunpack.c.l.b16 %v238
    %v275 = vunpack.c.l.b16 %v239
    %v276 = vunpack.c.l.b16 %v240
    %v277 = vunpack.c.l.b16 %v241
    %v278 = vunpack.c.l.b16 %v242
    %v279 = vunpack.c.l.b16 %v243
    %v280 = vunpack.c.l.b16 %v244
    %v281 = vunpack.c.l.b16 %v245
    %v282 = vunpack.c.l.b16 %v246
    %v283 = vunpack.c.l.b16 %v247
    %v284 = vunpack.c.l.b16 %v248
    %v285 = vunpack.c.l.b16 %v249
    %v286 = vunpack.c.l.b16 %v250
    %v287 = vpack.c.b16 %v272, %v271
    %v288 = vpack.c.b16 %v274, %v273
    %v289 = vpack.c.b16 %v276, %v275
    %v290 = vpack.c.b16 %v278, %v277
    %v291 = vpack.c.b16 %v280, %v279
    %v292 = vpack.c.b16 %v282, %v281
    %v293 = vpack.c.b16 %v284, %v283
    %v294 = vpack.c.b16 %v286, %v285
    %303 = vmatpush.bf16.msra.mxu0 %v294
    %304 = vmatpush.bf16.msra.mxu0 %v293
    %305 = vmatpush.bf16.msra.mxu0 %v292
    %306 = vmatpush.bf16.msra.mxu0 %v291
    %307 = vmatpush.bf16.msra.mxu0 %v290
    %308 = vmatpush.bf16.msra.mxu0 %v289
    %309 = vmatpush.bf16.msra.mxu0 %v288
    %310 = vmatpush.bf16.msra.mxu0 %v287
    %311 = vmatmul.bf16.gmra.mxu0 %v234
    %v312 = vpop.f32.mrf.mxu0
    %v313 = vadd.f32 %v253, %v312
    %v314 = vpop.f32.mrf.mxu0
    %315 = vdwg.mxu0
    %vm316 = vcmask 1041408
    %v317 = vsel %vm316, %v313, -inf
    %318 = vmax.xlane.f32.xlu0 %v317
    %v319 = vpop.xlane.xlu0 %318
    %v320 = vsub.f32 %v313, %v319
    %v321 = vmul.f32 %v320, 1.442695
    %v322 = vpow.pop %v321
    %v323 = vsel %vm316, %v322, 0.0
    %324 = vadd.xlane.f32.xlu0 %v323
    %v325 = vpop.xlane.xlu0 %324
    %v326 = vlog2.pop %v325
    %v327 = vmul.f32 %v326, 0.6931472
    %v328 = vsub.f32 %v320, %v327
    %329 = vst [vmem:[#allocation8] sm:$0x3] %v328
    // Predicated region
    $region34: #{tpu_custom_call.1} parent=1 // pred_check
      _
    $region35: #{tpu_custom_call.1} parent=1 // pred_check_branch
      %331 = sbr.rel (0) target = $region37
    $region36: #{tpu_custom_call.1} parent=1 // pred_region
      %333 = vsyncadd [#allocation4], 0
      %s335 = sshll.u32 [#allocation8], 4
      %s336 = int_to_ptr.vmem [resolvable:$true] %s335
      %s337 = sshll.u32 %s5, 4
      %s338 = int_to_ptr.hbm [resolvable:$true] %s337
      %340 = dma.vmem_to_hbm [thread:$0]  %s336, 32, %s338, [#allocation4]
    $region37: #{tpu_custom_call.1} parent=1 // pred_fallthru
      _
    // Predicated region
    $region38: #{tpu_custom_call.1} parent=1 // pred_check
      _
    $region39: #{tpu_custom_call.1} parent=1 // pred_check_branch
      %342 = sbr.rel (0) target = $region41
    $region40: #{tpu_custom_call.1} parent=1 // pred_region
      %344 = dma.done [#allocation4], 32
    $region41: #{tpu_custom_call.1} parent=1 // pred_fallthru
      _
    %345 = vsyncpa [#allocation3], 1
    %346 = vsyncpa [#allocation6], 1
    %347 = vsyncpa [#allocation4], 1

</llo_original>
